<compile_context>
chip_gen: v5e
topology: v5e:2x2
jax: 0.10.0
libtpu: 0.0.40
codegen_flags: <defaults>
</compile_context>

<pallas_src>
import functools

import jax
import jax.numpy as jnp
from jax import lax
from jax.experimental import pallas as pl
from jax.experimental.pallas import tpu as pltpu


_VMEM_LIMIT_BYTES = 48 * 1024 * 1024    # < v7x's 64 MiB physical; >> working set on all gens
_TARGET_TILE_BYTES = 4 * 1024 * 1024    # f32 bytes of tiled inputs per grid step


def _round_up(x, m):
    return ((x + m - 1) // m) * m


def _choose_tile_n(n_rows, n_classes, num_big_inputs):
    """Largest multiple-of-8 row tile keeping per-step input bytes near the target."""
    bytes_per_row = max(1, n_classes * 4 * num_big_inputs)  # size with f32 (kernel upcasts)
    tile = _TARGET_TILE_BYTES // bytes_per_row
    tile = max(8, (tile // 8) * 8)
    tile = min(tile, _round_up(n_rows, 8))                  # don't over-pad tiny batches
    return max(8, tile)


# ---------------------------------------------------------------------------
# Kernels
# ---------------------------------------------------------------------------
def _soft_ce_kernel(x_ref, t_ref, loss_ref):
    """Per-row soft-target CE: loss_row = sum_c(-t * log_softmax(x))."""
    x = x_ref[...].astype(jnp.float32)                      # (TN, C)
    t = t_ref[...].astype(jnp.float32)                      # (TN, C)

    m = jnp.max(x, axis=-1, keepdims=True)                  # (TN, 1)
    z = x - m
    lse = jnp.log(jnp.sum(jnp.exp(z), axis=-1, keepdims=True))  # (TN, 1)

    # sum(-t * (z - lse)) == lse * sum(t) - sum(t * z)  (no logp materialization)
    t_sum = jnp.sum(t, axis=-1, keepdims=True)
    tz_sum = jnp.sum(t * z, axis=-1, keepdims=True)
    loss_ref[...] = lse * t_sum - tz_sum                    # padded rows (t == 0) -> 0


def _hard_ce_kernel(x_ref, lab_ref, loss_ref, *, total_rows):
    """Per-row hard-label CE: loss_row = lse - z[label] (no one-hot in HBM)."""
    x = x_ref[...].astype(jnp.float32)                      # (TN, C)
    labels = lab_ref[...]                                   # (TN, 1) int32
    tn, c = x.shape

    m = jnp.max(x, axis=-1, keepdims=True)
    z = x - m
    lse = jnp.log(jnp.sum(jnp.exp(z), axis=-1, keepdims=True))

    col = lax.broadcasted_iota(jnp.int32, (tn, c), 1)
    z_at = jnp.sum(jnp.where(col == labels, z, 0.0), axis=-1, keepdims=True)

    # Mask padded rows via global row index.
    row = pl.program_id(0) * tn + lax.broadcasted_iota(jnp.int32, (tn, 1), 0)
    valid = row < total_rows
    loss_ref[...] = jnp.where(valid, lse - z_at, 0.0)


# ---------------------------------------------------------------------------
# Wrappers
# ---------------------------------------------------------------------------
def _soft_target_cross_entropy_2d(logits, soft_targets, tile_n=None):
    """logits, soft_targets: (N, C) (any float dtype). Returns scalar f32 mean loss."""
    N, C = logits.shape
    assert soft_targets.shape == (N, C)
    if tile_n is None:
        tile_n = _choose_tile_n(N, C, num_big_inputs=2)
    n_tiles = pl.cdiv(N, tile_n)
    n_pad = n_tiles * tile_n
    if n_pad != N:
        logits = jnp.pad(logits, ((0, n_pad - N), (0, 0)))
        soft_targets = jnp.pad(soft_targets, ((0, n_pad - N), (0, 0)))

    # TODO(synk): for vocabulary-scale C add a class-axis grid dim with an online
    # (flash-style) running max/lse so the per-block VMEM footprint stays bounded.
    row_losses = pl.pallas_call(
        _soft_ce_kernel,
        out_shape=jax.ShapeDtypeStruct((n_pad, 1), jnp.float32),
        grid_spec=pltpu.PrefetchScalarGridSpec(
            num_scalar_prefetch=0,
            grid=(n_tiles,),
            in_specs=[
                pl.BlockSpec((tile_n, C), lambda i: (i, 0)),
                pl.BlockSpec((tile_n, C), lambda i: (i, 0)),
            ],
            out_specs=pl.BlockSpec((tile_n, 1), lambda i: (i, 0)),
        ),
        compiler_params=pltpu.CompilerParams(
            dimension_semantics=("parallel",),       # no carried state -> megacore-friendly
            vmem_limit_bytes=_VMEM_LIMIT_BYTES,
        ),
    )(logits, soft_targets)
    return jnp.sum(row_losses) / jnp.float32(N)


def _hard_label_cross_entropy(logits, labels, tile_n=None):
    """logits: (N, C), labels: (N,) int. Returns scalar f32 mean loss."""
    N, C = logits.shape
    if tile_n is None:
        tile_n = _choose_tile_n(N, C, num_big_inputs=1)
    n_tiles = pl.cdiv(N, tile_n)
    n_pad = n_tiles * tile_n
    if n_pad != N:
        logits = jnp.pad(logits, ((0, n_pad - N), (0, 0)))
        labels = jnp.pad(labels, ((0, n_pad - N),))
    labels2d = labels.astype(jnp.int32).reshape(n_pad, 1)

    kernel = functools.partial(_hard_ce_kernel, total_rows=N)
    row_losses = pl.pallas_call(
        kernel,
        out_shape=jax.ShapeDtypeStruct((n_pad, 1), jnp.float32),
        grid_spec=pltpu.PrefetchScalarGridSpec(
            num_scalar_prefetch=0,
            grid=(n_tiles,),
            in_specs=[
                pl.BlockSpec((tile_n, C), lambda i: (i, 0)),
                pl.BlockSpec((tile_n, 1), lambda i: (i, 0)),
            ],
            out_specs=pl.BlockSpec((tile_n, 1), lambda i: (i, 0)),
        ),
        compiler_params=pltpu.CompilerParams(
            dimension_semantics=("parallel",),
            vmem_limit_bytes=_VMEM_LIMIT_BYTES,
        ),
    )(logits, labels2d)
    return jnp.sum(row_losses) / jnp.float32(N)


class SoftTargetCrossEntropy:
    """JAX/Pallas port of cap.models.losses.cross_entropy_loss.SoftTargetCrossEntropy."""

    def __init__(self, loss_name=None):
        self.loss_name = loss_name

    def __call__(self, input, target):
        if target.ndim == 1:
            # F.cross_entropy(input, int_labels) with default reduction='mean'.
            # TODO(synk): ignore_index=-100 / per-class weights of F.cross_entropy are
            # not implemented (PyTorch defaults are unused by this module's callers).
            loss_cls = _hard_label_cross_entropy(input, target)
        else:
            C = input.shape[-1]
            loss_cls = _soft_target_cross_entropy_2d(
                input.reshape(-1, C), target.reshape(-1, C))
        if self.loss_name is None:
            return loss_cls
        return {self.loss_name: loss_cls}


# ---------------------------------------------------------------------------
# Reference & self-test
# ---------------------------------------------------------------------------
def _reference(input, target):
    if target.ndim == 1:
        target = jax.nn.one_hot(target, input.shape[-1], dtype=jnp.float32)
    logp = jax.nn.log_softmax(input.astype(jnp.float32), axis=-1)
    loss = jnp.sum(-target.astype(jnp.float32) * logp, axis=-1)
    return jnp.mean(loss)


if __name__ == "__main__":
    key = jax.random.PRNGKey(0)
    k1, k2, k3, k4, k5 = jax.random.split(key, 5)

    # --- soft-target branch, N not a multiple of 8 (exercises padding) ---
    N, C = 10, 32
    logits = jax.random.normal(k1, (N, C), dtype=jnp.float32)
    soft_targets = jax.nn.softmax(jax.random.normal(k2, (N, C), dtype=jnp.float32), axis=-1)

    loss_mod = SoftTargetCrossEntropy(loss_name=None)
    loss_soft = loss_mod(logits, soft_targets)
    jax.block_until_ready(loss_soft)
    ref_soft = _reference(logits, soft_targets)
    assert jnp.allclose(loss_soft, ref_soft, atol=1e-5, rtol=1e-5), (loss_soft, ref_soft)

    # --- soft-target branch, bf16 logits, multiple tiles (forced tile_n=8) ---
    N2 = 24
    logits_bf16 = jax.random.normal(k3, (N2, C), dtype=jnp.float32).astype(jnp.bfloat16)
    soft2 = jax.nn.softmax(jax.random.normal(k4, (N2, C), dtype=jnp.float32), axis=-1)
    loss_multi = _soft_target_cross_entropy_2d(logits_bf16, soft2, tile_n=8)
    jax.block_until_ready(loss_multi)
    ref_multi = _reference(logits_bf16.astype(jnp.float32), soft2)
    assert jnp.allclose(loss_multi, ref_multi, atol=1e-5, rtol=1e-5), (loss_multi, ref_multi)

    # --- hard-label branch (target.ndim == 1 -> F.cross_entropy semantics) ---
    labels = jax.random.randint(k5, (N,), 0, C)
    named_mod = SoftTargetCrossEntropy(loss_name="cls_loss")
    out_dict = named_mod(logits, labels)
    jax.block_until_ready(out_dict["cls_loss"])
    ref_hard = _reference(logits, labels)
    assert jnp.allclose(out_dict["cls_loss"], ref_hard, atol=1e-5, rtol=1e-5), (
        out_dict["cls_loss"], ref_hard)

    print("KERNEL_OK")
</pallas_src>

<mosaic_0001>
module attributes {stable_mosaic.version = 11 : i64} {
  func.func @_soft_ce_kernel(%arg0: i32, %arg1: memref<16x32xf32, #tpu.memory_space<vmem>>, %arg2: memref<16x32xf32, #tpu.memory_space<vmem>>, %arg3: memref<16x1xf32, #tpu.memory_space<vmem>>) attributes {dimension_semantics = [#tpu.dimension_semantics<parallel>], iteration_bounds = array<i64: 1>, scalar_prefetch = 0 : i64, scratch_operands = 0 : i64, tpu.core_type = #tpu.core_type<tc>, window_params = [{transform_indices = @transform_0, window_bounds = array<i64: 16, 32>}, {transform_indices = @transform_1, window_bounds = array<i64: 16, 32>}, {transform_indices = @transform_2, window_bounds = array<i64: 16, 1>}]} {
    %c0 = arith.constant 0 : index
    %c0_0 = arith.constant 0 : index
    %0 = vector.load %arg1[%c0, %c0_0] : memref<16x32xf32, #tpu.memory_space<vmem>>, vector<16x32xf32>
    %c0_1 = arith.constant 0 : index
    %c0_2 = arith.constant 0 : index
    %1 = vector.load %arg2[%c0_1, %c0_2] : memref<16x32xf32, #tpu.memory_space<vmem>>, vector<16x32xf32>
    %cst = arith.constant dense<0xFF800000> : vector<16xf32>
    %2 = vector.multi_reduction <maximumf>, %0, %cst [1] : vector<16x32xf32> to vector<16xf32>
    %3 = vector.shape_cast %2 : vector<16xf32> to vector<16x1xf32>
    %4 = vector.broadcast %3 : vector<16x1xf32> to vector<16x32xf32>
    %5 = arith.subf %0, %4 : vector<16x32xf32>
    %6 = math.exp %5 : vector<16x32xf32>
    %cst_3 = arith.constant dense<0.000000e+00> : vector<16xf32>
    %7 = vector.multi_reduction <add>, %6, %cst_3 [1] : vector<16x32xf32> to vector<16xf32>
    %8 = vector.shape_cast %7 : vector<16xf32> to vector<16x1xf32>
    %9 = math.log %8 : vector<16x1xf32>
    %cst_4 = arith.constant dense<0.000000e+00> : vector<16xf32>
    %10 = vector.multi_reduction <add>, %1, %cst_4 [1] : vector<16x32xf32> to vector<16xf32>
    %11 = vector.shape_cast %10 : vector<16xf32> to vector<16x1xf32>
    %12 = arith.mulf %1, %5 : vector<16x32xf32>
    %cst_5 = arith.constant dense<0.000000e+00> : vector<16xf32>
    %13 = vector.multi_reduction <add>, %12, %cst_5 [1] : vector<16x32xf32> to vector<16xf32>
    %14 = vector.shape_cast %13 : vector<16xf32> to vector<16x1xf32>
    %15 = arith.mulf %9, %11 : vector<16x1xf32>
    %16 = arith.subf %15, %14 : vector<16x1xf32>
    %c0_6 = arith.constant 0 : index
    %c0_7 = arith.constant 0 : index
    %17 = vector.load %arg3[%c0_6, %c0_7] : memref<16x1xf32, #tpu.memory_space<vmem>>, vector<16x1xf32>
    tpu.vector_store %arg3[%c0_6, %c0_7], %16 {strides = array<i32>} : memref<16x1xf32, #tpu.memory_space<vmem>>, vector<16x1xf32>,
    return
  }
  func.func @transform_0(%arg0: i32) -> (i32, i32) {
    %c0_i32 = arith.constant 0 : i32
    %c0_i32_0 = arith.constant 0 : i32
    return %arg0, %c0_i32 : i32, i32
  }
  func.func @transform_1(%arg0: i32) -> (i32, i32) {
    %c0_i32 = arith.constant 0 : i32
    %c0_i32_0 = arith.constant 0 : i32
    return %arg0, %c0_i32 : i32, i32
  }
  func.func @transform_2(%arg0: i32) -> (i32, i32) {
    %c0_i32 = arith.constant 0 : i32
    %c0_i32_0 = arith.constant 0 : i32
    return %arg0, %c0_i32 : i32, i32
  }
}

</mosaic_0001>

<llo_original>
// kernel: tpu_custom_call.1
$region0: #{tpu_custom_call.1}
  #allocation0 [shape = 'u32[]', space=smem, size = 0x4, offset = 0x4, fixed_abs, tag = 'smem constant byte address 0x4 - core index']
  #allocation1 [shape = 'u32[72,128]{1,0:T(1,128)}', space=vmem, size = 0x9000, scoped, tag = 'internal scratch']
  %s0 = inlined_call_operand.hbm [shape: f32[16,32], index: 0, kind: input, shape index: {}]
  %s1 = inlined_call_operand.hbm [shape: f32[16,32], index: 1, kind: input, shape index: {}]
  %s2 = inlined_call_operand.vmem [shape: f32[16,1], index: 2, kind: output, shape index: {}]
  %s3 = sld [smem:[#allocation0]]
  $region26: #{tpu_custom_call.1} parent=0
    _
  %s5 = ssub.s32 1, %s3
  %s6 = scalar_select 0, %s5, %s3
  $region1: #{tpu_custom_call.1} parent=0
    #allocation2 [shape = 'u8[8192]{0}', space=vmem, size = 0x2000, scoped, tag = 'input window, operand 0, single buffered']
    #allocation3 [shape = 's32[1]{0}', space=sflag, size = 0x4, scoped, tag = 'scoped memory for tpu_custom_call.1']
    #allocation4 [shape = 'u8[8192]{0}', space=vmem, size = 0x2000, scoped, tag = 'input window, operand 1, single buffered']
    #allocation5 [shape = 's32[1]{0}', space=sflag, size = 0x4, scoped, tag = 'scoped memory for tpu_custom_call.1']
    %7 = vsyncpa [#allocation3], 0
    %8 = vsyncpa [#allocation5], 0
    // Predicated region
    $region2: #{tpu_custom_call.1} parent=1 // pred_check
      _
    $region3: #{tpu_custom_call.1} parent=1 // pred_check_branch
      %10 = sbr.rel (0) target = $region5
    $region4: #{tpu_custom_call.1} parent=1 // pred_region
      %12 = vsyncadd [#allocation3], 0
      %s13 = sshll.u32 %s0, 4
      %s14 = int_to_ptr.hbm [resolvable:$true] %s13
      %s15 = sshll.u32 [#allocation2], 4
      %s16 = int_to_ptr.vmem [resolvable:$true] %s15
      %21 = dma.hbm_to_vmem [thread:$0]  %s14, 256, %s16, [#allocation3], 128, 128, 8
    $region5: #{tpu_custom_call.1} parent=1 // pred_fallthru
      _
    // Predicated region
    $region6: #{tpu_custom_call.1} parent=1 // pred_check
      _
    $region7: #{tpu_custom_call.1} parent=1 // pred_check_branch
      %23 = sbr.rel (0) target = $region9
    $region8: #{tpu_custom_call.1} parent=1 // pred_region
      %25 = vsyncadd [#allocation5], 0
      %s26 = sshll.u32 %s1, 4
      %s27 = int_to_ptr.hbm [resolvable:$true] %s26
      %s28 = sshll.u32 [#allocation4], 4
      %s29 = int_to_ptr.vmem [resolvable:$true] %s28
      %34 = dma.hbm_to_vmem [thread:$0]  %s27, 256, %s29, [#allocation5], 128, 128, 8
    $region9: #{tpu_custom_call.1} parent=1 // pred_fallthru
      _
    // Predicated region
    $region10: #{tpu_custom_call.1} parent=1 // pred_check
      _
    $region11: #{tpu_custom_call.1} parent=1 // pred_check_branch
      %36 = sbr.rel (0) target = $region13
    $region12: #{tpu_custom_call.1} parent=1 // pred_region
      %38 = dma.done [#allocation3], 256
    $region13: #{tpu_custom_call.1} parent=1 // pred_fallthru
      _
    // Predicated region
    $region14: #{tpu_custom_call.1} parent=1 // pred_check
      _
    $region15: #{tpu_custom_call.1} parent=1 // pred_check_branch
      %40 = sbr.rel (0) target = $region17
    $region16: #{tpu_custom_call.1} parent=1 // pred_region
      %42 = dma.done [#allocation5], 256
    $region17: #{tpu_custom_call.1} parent=1 // pred_fallthru
      _
    %v43 = vld [vmem:[#allocation2] sm:$0xff]
    %v44 = vld [vmem:[#allocation2 + $0x8] sm:$0xff]
    %v45 = vld [vmem:[#allocation4] sm:$0xff]
    %v46 = vld [vmem:[#allocation4 + $0x8] sm:$0xff]
    %vm47 = vcmask 261120
    %v48 = vsel %vm47, %v43, -inf
    %49 = vmax.xlane.f32.xlu0 %v48
    %v50 = vpop.xlane.xlu0 %49
    %v51 = vsel %vm47, %v44, -inf
    %52 = vmax.xlane.f32.xlu0 %v51
    %v53 = vpop.xlane.xlu0 %52
    %v54 = vsub.f32 %v43, %v50
    %v55 = vsub.f32 %v44, %v53
    %v56 = vmul.f32 %v54, 1.442695
    %v57 = vpow.pop %v56
    %v58 = vmul.f32 %v55, 1.442695
    %v59 = vpow.pop %v58
    %v60 = vsel %vm47, %v57, 0.0
    %61 = vadd.xlane.f32.xlu0 %v60
    %v62 = vpop.xlane.xlu0 %61
    %v63 = vsel %vm47, %v59, 0.0
    %64 = vadd.xlane.f32.xlu0 %v63
    %v65 = vpop.xlane.xlu0 %64
    %v66 = vlog2.pop %v62
    %v67 = vmul.f32 %v66, 0.6931472
    %v68 = vlog2.pop %v65
    %v69 = vmul.f32 %v68, 0.6931472
    %v70 = vsel %vm47, %v45, 0.0
    %71 = vadd.xlane.f32.xlu0 %v70
    %v72 = vpop.xlane.xlu0 %71
    %v73 = vsel %vm47, %v46, 0.0
    %74 = vadd.xlane.f32.xlu0 %v73
    %v75 = vpop.xlane.xlu0 %74
    %v76 = vmul.f32 %v45, %v54
    %v77 = vmul.f32 %v46, %v55
    %v78 = vsel %vm47, %v76, 0.0
    %79 = vadd.xlane.f32.xlu0 %v78
    %v80 = vpop.xlane.xlu0 %79
    %v81 = vsel %vm47, %v77, 0.0
    %82 = vadd.xlane.f32.xlu0 %v81
    %v83 = vpop.xlane.xlu0 %82
    %v84 = vmul.f32 %v67, %v72
    %v85 = vmul.f32 %v69, %v75
    %v86 = vsub.f32 %v84, %v80
    %v87 = vsub.f32 %v85, %v83
    %vm88 = vcmask 7168
    %89 = vst.msk [vmem:[%s2] sm:$0xff] %vm88, %v86
    %90 = vst.msk [vmem:[%s2 + $0x8] sm:$0xff] %vm88, %v87
    // Predicated region
    $region18: #{tpu_custom_call.1} parent=1 // pred_check
      _
    $region19: #{tpu_custom_call.1} parent=1 // pred_check_branch
      %92 = sbr.rel (0) target = $region21
    $region20: #{tpu_custom_call.1} parent=1 // pred_region
      _
    $region21: #{tpu_custom_call.1} parent=1 // pred_fallthru
      _
    // Predicated region
    $region22: #{tpu_custom_call.1} parent=1 // pred_check
      _
    $region23: #{tpu_custom_call.1} parent=1 // pred_check_branch
      %94 = sbr.rel (0) target = $region25
    $region24: #{tpu_custom_call.1} parent=1 // pred_region
      _
    $region25: #{tpu_custom_call.1} parent=1 // pred_fallthru
      _
    %95 = vsyncpa [#allocation3], 1
    %96 = vsyncpa [#allocation5], 1

</llo_original>
